<compile_context>
chip_gen: v5e
topology: v5e:2x2
jax: 0.10.0
libtpu: 0.0.40
codegen_flags: <defaults>
</compile_context>

<pallas_src>
import jax
import jax.numpy as jnp
from jax.experimental import pallas as pl
from jax.experimental.pallas import tpu as pltpu


def _attention_kernel(x_ref, v_ref, xo_ref, m_ref):
    # x_ref:  (bt, C, HW)  bt batch elements, NCHW layout (HW on lanes)
    # v_ref:  (C, 1)       fused 1x1-conv weight column (w1 @ w2^T), f32
    # xo_ref: (bt, C, HW)  x + x * attn_mask   (input dtype)
    # m_ref:  (bt, 1, HW)  attn_mask (softmax over HW), f32
    v = v_ref[...]                                            # (C, 1) f32
    bt = x_ref.shape[0]
    for i in range(bt):                                       # bt is small & static
        x = x_ref[i].astype(jnp.float32)                      # (C, HW) upcast (v5e: f32 VPU only)

        # Fused convs as a VPU multiply + channel (sublane) reduction: s = v . x
        # (bias term cancels under softmax, so it is omitted — exact).
        s = jnp.sum(x * v, axis=0, keepdims=True)             # (1, HW) f32

        # Softmax over the spatial (lane) axis.
        s_max = jnp.max(s, axis=-1, keepdims=True)
        e = jnp.exp(s - s_max)
        denom = jnp.sum(e, axis=-1, keepdims=True)
        mask = e * pl.reciprocal(denom, approx=True)          # (1, HW), EUP reciprocal

        # out = x + x*mask = x * (1 + mask)   (mask broadcast over channels)
        xo_ref[i] = (x * (1.0 + mask)).astype(xo_ref.dtype)
        m_ref[i] = mask.astype(m_ref.dtype)


def _default_batch_block(B, C, HW, x_bytes):
    """Pick Bt: big enough to amortize per-step overhead, small enough for VMEM,
    and (when possible) leaving >=2 grid steps so both v7x TensorCores get work."""
    budget = 16 * 1024 * 1024                         # conservative per-step VMEM budget
    per_batch = 2 * (2 * C * HW * x_bytes + HW * 4)   # double-buffered in+out+mask
    cap = max(1, budget // max(per_batch, 1))
    if B >= 2:
        cap = min(cap, pl.cdiv(B, 2))                 # keep >=2 grid steps for v7x
    bt = 1
    for d in range(1, min(B, cap) + 1):               # largest divisor of B <= cap
        if B % d == 0:
            bt = d
    return bt


def attention_model_forward(x_nchw, w1, b1, w2, b2, *, batch_block=None):
    """x_nchw: (B, 512, H, W) in f32 or bf16.
    w1: (C, Hh) = conv1.weight^T, b1: (1, Hh), w2: (1, Hh) = conv2.weight, b2: (1, 1).
    Returns (x_out NCHW, same dtype as x; attn_mask (B, 1, H, W) f32)."""
    B, C, H, W = x_nchw.shape
    HW = H * W

    # Biases add the same constant at every spatial position -> exactly cancelled by
    # the spatial softmax.  They are therefore not needed by the kernel at all.
    del b1, b2

    # Fused 1x1-conv weights as a channel column (C, 1), kept in f32.
    v_col = (w1 @ w2.T).astype(jnp.float32)                   # (C, 1)

    # NCHW -> (B, C, HW): pure reshape, no transpose / extra HBM traffic.
    x_tok = x_nchw.reshape(B, C, HW)
    x_bytes = jnp.dtype(x_tok.dtype).itemsize

    bt = batch_block if batch_block is not None else _default_batch_block(B, C, HW, x_bytes)
    assert B % bt == 0, "batch_block must divide the batch size"
    grid = (B // bt,)

    # VMEM budget from the actual block sizes (double-buffered in/out + mask + weights),
    # with generous headroom; clamped to stay within every generation's physical VMEM.
    step_bytes = 2 * (2 * bt * C * HW * x_bytes + bt * HW * 4) + 2 * C * 4
    vmem_limit = int(min(max(2 * step_bytes + (8 << 20), 16 << 20), 64 << 20))

    # Memory-bound cost hint for XLA's scheduler.
    cost = pl.CostEstimate(
        flops=int(B * (4 * C * HW + 8 * HW)),
        transcendentals=int(B * HW),
        bytes_accessed=int(2 * B * C * HW * x_bytes + B * HW * 4 + C * 4),
    )

    out_x, out_m = pl.pallas_call(
        _attention_kernel,
        out_shape=(
            jax.ShapeDtypeStruct((B, C, HW), x_tok.dtype),
            jax.ShapeDtypeStruct((B, 1, HW), jnp.float32),
        ),
        grid=grid,
        in_specs=[
            pl.BlockSpec((bt, C, HW), lambda b: (b, 0, 0)),
            pl.BlockSpec((C, 1), lambda b: (0, 0)),
        ],
        out_specs=(
            pl.BlockSpec((bt, C, HW), lambda b: (b, 0, 0)),
            pl.BlockSpec((bt, 1, HW), lambda b: (b, 0, 0)),
        ),
        compiler_params=pltpu.CompilerParams(
            dimension_semantics=("parallel",),      # megacore / v7x: both TCs
            vmem_limit_bytes=vmem_limit,
        ),
        cost_estimate=cost,
    )(x_tok, v_col)

    x_out = out_x.reshape(B, C, H, W)               # still NCHW, reshape only
    attn_mask = out_m.reshape(B, 1, H, W)
    return x_out, attn_mask


def _reference(x_nchw, w1, b1, w2, b2):
    """Plain-JAX f32 reference mirroring the (unfused) PyTorch forward."""
    B, C, H, W = x_nchw.shape
    x_tok = jnp.transpose(x_nchw, (0, 2, 3, 1)).reshape(B, H * W, C)
    h = x_tok @ w1 + b1                                    # (B, HW, Hh)
    s = jnp.sum(h * w2, axis=-1) + b2[0, 0]                # (B, HW)
    mask = jax.nn.softmax(s, axis=1)                       # softmax over spatial
    mask_nchw = mask.reshape(B, 1, H, W)
    return x_nchw + x_nchw * mask_nchw, mask_nchw


if __name__ == "__main__":
    key = jax.random.PRNGKey(0)
    B, C, H, W = 2, 512, 16, 16        # in_channels fixed at 512 by the module; HW=256 lane-dense
    HIDDEN = 380                       # attn_hidden_layer default

    k1, k2, k3, k4, k5 = jax.random.split(key, 5)
    x = jax.random.normal(k1, (B, C, H, W), dtype=jnp.float32)

    # deterministic parameter init (1x1 conv weights stored as matmul operands)
    w1 = jax.random.normal(k2, (C, HIDDEN), dtype=jnp.float32) * 0.02   # conv1.weight^T
    b1 = jax.random.normal(k3, (1, HIDDEN), dtype=jnp.float32) * 0.02   # conv1.bias
    w2 = jax.random.normal(k4, (1, HIDDEN), dtype=jnp.float32) * 0.02   # conv2.weight
    b2 = jax.random.normal(k5, (1, 1), dtype=jnp.float32) * 0.02        # conv2.bias

    # --- Run 1: f32 activations, default batch blocking (grid=2 -> both v7x TCs) ---
    x_out, attn_mask = attention_model_forward(x, w1, b1, w2, b2)
    jax.block_until_ready((x_out, attn_mask))

    x_ref, m_ref = _reference(x, w1, b1, w2, b2)
    assert x_out.shape == (B, C, H, W)
    assert attn_mask.shape == (B, 1, H, W)
    assert jnp.allclose(x_out, x_ref, atol=1e-4, rtol=1e-4)
    assert jnp.allclose(attn_mask, m_ref, atol=2e-5, rtol=1e-3)

    # --- Run 2: bf16 activation I/O (halves HBM bytes), whole batch in one block ---
    x_bf16 = x.astype(jnp.bfloat16)
    x_out_b, attn_mask_b = attention_model_forward(x_bf16, w1, b1, w2, b2, batch_block=B)
    jax.block_until_ready((x_out_b, attn_mask_b))

    x_q = x_bf16.astype(jnp.float32)                 # reference on the bf16-rounded input
    x_ref_b, m_ref_b = _reference(x_q, w1, b1, w2, b2)
    assert x_out_b.dtype == jnp.bfloat16
    assert jnp.allclose(x_out_b.astype(jnp.float32), x_ref_b, atol=3e-2, rtol=3e-2)
    assert jnp.allclose(attn_mask_b, m_ref_b, atol=2e-5, rtol=1e-3)

    print("KERNEL_OK")
</pallas_src>

<mosaic_0001>
module attributes {stable_mosaic.version = 11 : i64} {
  func.func @_attention_kernel(%arg0: i32, %arg1: memref<1x512x256xf32, #tpu.memory_space<vmem>>, %arg2: memref<512x1xf32, #tpu.memory_space<vmem>>, %arg3: memref<1x512x256xf32, #tpu.memory_space<vmem>>, %arg4: memref<1x1x256xf32, #tpu.memory_space<vmem>>) attributes {dimension_semantics = [#tpu.dimension_semantics<parallel>], iteration_bounds = array<i64: 2>, scalar_prefetch = 0 : i64, scratch_operands = 0 : i64, tpu.core_type = #tpu.core_type<tc>, window_params = [{transform_indices = @transform_0, window_bounds = array<i64: 1, 512, 256>}, {pipeline_mode = #tpu.pipeline_mode<synchronous>, transform_indices = @transform_1, window_bounds = array<i64: 512, 1>}, {transform_indices = @transform_2, window_bounds = array<i64: 1, 512, 256>}, {transform_indices = @transform_3, window_bounds = array<i64: 1, 1, 256>}]} {
    %c0 = arith.constant 0 : index
    %c0_0 = arith.constant 0 : index
    %0 = vector.load %arg2[%c0, %c0_0] : memref<512x1xf32, #tpu.memory_space<vmem>>, vector<512x1xf32>
    %c0_1 = arith.constant 0 : index
    %c0_2 = arith.constant 0 : index
    %c0_3 = arith.constant 0 : index
    %1 = vector.load %arg1[%c0_1, %c0_2, %c0_3] : memref<1x512x256xf32, #tpu.memory_space<vmem>>, vector<1x512x256xf32>
    %2 = vector.shape_cast %1 : vector<1x512x256xf32> to vector<512x256xf32>
    %3 = vector.broadcast %0 : vector<512x1xf32> to vector<512x256xf32>
    %4 = arith.mulf %2, %3 : vector<512x256xf32>
    %cst = arith.constant dense<0.000000e+00> : vector<256xf32>
    %5 = vector.multi_reduction <add>, %4, %cst [0] : vector<512x256xf32> to vector<256xf32>
    %6 = vector.shape_cast %5 : vector<256xf32> to vector<1x256xf32>
    %cst_4 = arith.constant dense<0xFF800000> : vector<1xf32>
    %7 = vector.multi_reduction <maximumf>, %6, %cst_4 [1] : vector<1x256xf32> to vector<1xf32>
    %8 = vector.shape_cast %7 : vector<1xf32> to vector<1x1xf32>
    %9 = vector.broadcast %8 : vector<1x1xf32> to vector<1x256xf32>
    %10 = arith.subf %6, %9 : vector<1x256xf32>
    %11 = math.exp %10 : vector<1x256xf32>
    %cst_5 = arith.constant dense<0.000000e+00> : vector<1xf32>
    %12 = vector.multi_reduction <add>, %11, %cst_5 [1] : vector<1x256xf32> to vector<1xf32>
    %13 = vector.shape_cast %12 : vector<1xf32> to vector<1x1xf32>
    %14 = tpu.reciprocal %13 {approx = true} : vector<1x1xf32> -> vector<1x1xf32>
    %15 = vector.broadcast %14 : vector<1x1xf32> to vector<1x256xf32>
    %16 = arith.mulf %11, %15 : vector<1x256xf32>
    %cst_6 = arith.constant 1.000000e+00 : f32
    %17 = vector.broadcast %cst_6 : f32 to vector<1x256xf32>
    %18 = arith.addf %17, %16 : vector<1x256xf32>
    %19 = vector.broadcast %18 : vector<1x256xf32> to vector<512x256xf32>
    %20 = arith.mulf %2, %19 : vector<512x256xf32>
    %c0_7 = arith.constant 0 : index
    %c0_8 = arith.constant 0 : index
    %c0_9 = arith.constant 0 : index
    %21 = vector.load %arg3[%c0_7, %c0_8, %c0_9] : memref<1x512x256xf32, #tpu.memory_space<vmem>>, vector<1x512x256xf32>
    %22 = vector.shape_cast %21 : vector<1x512x256xf32> to vector<512x256xf32>
    %23 = vector.shape_cast %20 : vector<512x256xf32> to vector<1x512x256xf32>
    tpu.vector_store %arg3[%c0_7, %c0_8, %c0_9], %23 {strides = array<i32>} : memref<1x512x256xf32, #tpu.memory_space<vmem>>, vector<1x512x256xf32>,
    %c0_10 = arith.constant 0 : index
    %c0_11 = arith.constant 0 : index
    %c0_12 = arith.constant 0 : index
    %24 = vector.load %arg4[%c0_10, %c0_11, %c0_12] : memref<1x1x256xf32, #tpu.memory_space<vmem>>, vector<1x1x256xf32>
    %25 = vector.shape_cast %24 : vector<1x1x256xf32> to vector<1x256xf32>
    %26 = vector.shape_cast %16 : vector<1x256xf32> to vector<1x1x256xf32>
    tpu.vector_store %arg4[%c0_10, %c0_11, %c0_12], %26 {strides = array<i32>} : memref<1x1x256xf32, #tpu.memory_space<vmem>>, vector<1x1x256xf32>,
    return
  }
  func.func @transform_0(%arg0: i32) -> (i32, i32, i32) {
    %c0_i32 = arith.constant 0 : i32
    %c0_i32_0 = arith.constant 0 : i32
    %c0_i32_1 = arith.constant 0 : i32
    return %arg0, %c0_i32, %c0_i32_0 : i32, i32, i32
  }
  func.func @transform_1(%arg0: i32) -> (i32, i32) {
    %c0_i32 = arith.constant 0 : i32
    %c0_i32_0 = arith.constant 0 : i32
    %c0_i32_1 = arith.constant 0 : i32
    return %c0_i32, %c0_i32_0 : i32, i32
  }
  func.func @transform_2(%arg0: i32) -> (i32, i32, i32) {
    %c0_i32 = arith.constant 0 : i32
    %c0_i32_0 = arith.constant 0 : i32
    %c0_i32_1 = arith.constant 0 : i32
    return %arg0, %c0_i32, %c0_i32_0 : i32, i32, i32
  }
  func.func @transform_3(%arg0: i32) -> (i32, i32, i32) {
    %c0_i32 = arith.constant 0 : i32
    %c0_i32_0 = arith.constant 0 : i32
    %c0_i32_1 = arith.constant 0 : i32
    return %arg0, %c0_i32, %c0_i32_0 : i32, i32, i32
  }
}

</mosaic_0001>

<llo_original>
// kernel: tpu_custom_call.1
$region0: #{tpu_custom_call.1}
  #allocation0 [shape = 'u32[]', space=smem, size = 0x4, offset = 0x4, fixed_abs, tag = 'smem constant byte address 0x4 - core index']
  #allocation1 [shape = 'u32[72,128]{1,0:T(1,128)}', space=vmem, size = 0x9000, scoped, tag = 'internal scratch']
  %s0 = inlined_call_operand.hbm [shape: f32[2,512,256], index: 0, kind: input, shape index: {}]
  %s1 = inlined_call_operand.vmem [shape: f32[512,1], index: 1, kind: input, shape index: {}]
  %s2 = inlined_call_operand.hbm [shape: f32[2,512,256], index: 2, kind: output, shape index: {0}]
  %s3 = inlined_call_operand.hbm [shape: f32[2,1,256], index: 3, kind: output, shape index: {1}]
  %4 = xla_tuple %s2, %s3
  %s5 = sld [smem:[#allocation0]]
  $region53: #{tpu_custom_call.1} parent=0
    _
  %s7 = ssub.s32 1, %s5
  %s8 = scalar_select 0, %s7, %s5
  $region1: #{tpu_custom_call.1} parent=0
    #allocation2 [shape = 'u8[1048576]{0}', space=vmem, size = 0x100000, scoped, tag = 'input window, operand 0']
    #allocation3 [shape = 's32[2]{0}', space=sflag, size = 0x8, scoped, tag = 'scoped memory for tpu_custom_call.1']
    #allocation4 [shape = 's32[2]{0}', space=sflag, size = 0x8, scoped, tag = 'scoped memory for tpu_custom_call.1']
    #allocation5 [shape = 'u8[1048576]{0}', space=vmem, size = 0x100000, scoped, tag = 'output window, operand 0']
    #allocation6 [shape = 'u8[2048]{0}', space=vmem, size = 0x800, scoped, tag = 'output window, operand 1']
    #allocation7 [shape = 's32[2]{0}', space=sflag, size = 0x8, scoped, tag = 'scoped memory for tpu_custom_call.1']
    %9 = vsyncpa [#allocation3], 0
    %s10 = scalar_lea.sflag [#allocation3], 1
    %11 = vsyncpa %s10, 0
    %12 = vsyncpa [#allocation4], 0
    %s13 = scalar_lea.sflag [#allocation4], 1
    %14 = vsyncpa %s13, 0
    %15 = vsyncpa [#allocation7], 0
    %s16 = scalar_lea.sflag [#allocation7], 1
    %17 = vsyncpa %s16, 0
    loop: start=0, step=1, limit=4
    $region2: #{tpu_custom_call.1} parent=1 // loop_pre_header
      _
    $region3: #{tpu_custom_call.1} parent=1 // loop_header
      %s19 = sphi 0, %s23
      %p20 = scmp.ge.s32.totalorder %s19, 4
      %s29 = sphi 0, %s31
      %s32 = sphi 0, %s29
      %s33 = sphi 0, %s32
      %s49 = sphi 0, %s33
      %s53 = sphi 0, %s53
      %s55 = sphi 0, %s53
      %s56 = sphi 0, %s55
      %s70 = sphi 0, %s56
      %s76 = sphi 0, %s78
      %s79 = sphi 0, %s76
      %s80 = sphi 0, %s79
      %s96 = sphi 0, %s80
      %s102 = sphi 0, %s104
      %s105 = sphi 0, %s102
      %s106 = sphi 0, %s105
      %s122 = sphi 0, %s106
    $region4: #{tpu_custom_call.1} parent=1 // loop_header_branch
      %22 = sbr.rel (%p20) target = $region8
    $region5: #{tpu_custom_call.1} parent=1 // loop_body
      %s24 = ssub.s32 %s19, 1
      %s25 = ssub.s32 %s19, 2
      %s26 = sadd.s32 %s19, 1
      %s27 = ssub.s32 %s19, %s26
      %p28 = scmp.eq.s32.totalorder %s27, 0
      %s30 = sadd.s32 %s29, 1
      %s31 = scalar_select %p28, %s29, %s30
      %p34 = pneg %p28
      %p35 = scmp.eq.s32.totalorder %s19, 1
      %p36 = por %p34, %p35
      %p37 = scmp.ne.s32.totalorder %s29, %s32
      %p38 = scmp.eq.s32.totalorder %s19, 0
      %p39 = por %p37, %p38
      %p40 = scmp.ne.s32.totalorder %s29, %s32
      %p41 = scmp.eq.s32.totalorder %s24, 1
      %p42 = por %p40, %p41
      %p43 = scmp.ne.s32.totalorder %s32, %s33
      %p44 = scmp.eq.s32.totalorder %s24, 0
      %p45 = por %p43, %p44
      %p46 = scmp.ne.s32.totalorder %s32, %s33
      %p47 = scmp.eq.s32.totalorder %s25, 1
      %p48 = por %p46, %p47
      %p50 = scmp.ne.s32.totalorder %s33, %s49
      %p51 = scmp.eq.s32.totalorder %s25, 0
      %p52 = por %p50, %p51
      %s54 = sadd.s32 %s53, 1
      %p57 = scmp.eq.s32.totalorder %s19, 1
      %p58 = scmp.ne.s32.totalorder %s53, %s55
      %p59 = scmp.eq.s32.totalorder %s19, 0
      %p60 = por %p58, %p59
      %p61 = scmp.ne.s32.totalorder %s53, %s55
      %p62 = scmp.eq.s32.totalorder %s24, 1
      %p63 = por %p61, %p62
      %p64 = scmp.ne.s32.totalorder %s55, %s56
      %p65 = scmp.eq.s32.totalorder %s24, 0
      %p66 = por %p64, %p65
      %p67 = scmp.ne.s32.totalorder %s55, %s56
      %p68 = scmp.eq.s32.totalorder %s25, 1
      %p69 = por %p67, %p68
      %p71 = scmp.ne.s32.totalorder %s56, %s70
      %p72 = scmp.eq.s32.totalorder %s25, 0
      %p73 = por %p71, %p72
      %s74 = ssub.s32 %s19, %s26
      %p75 = scmp.eq.s32.totalorder %s74, 0
      %s77 = sadd.s32 %s76, 1
      %s78 = scalar_select %p75, %s76, %s77
      %p81 = pneg %p75
      %p82 = scmp.eq.s32.totalorder %s19, 1
      %p83 = por %p81, %p82
      %p84 = scmp.ne.s32.totalorder %s76, %s79
      %p85 = scmp.eq.s32.totalorder %s19, 0
      %p86 = por %p84, %p85
      %p87 = scmp.ne.s32.totalorder %s76, %s79
      %p88 = scmp.eq.s32.totalorder %s24, 1
      %p89 = por %p87, %p88
      %p90 = scmp.ne.s32.totalorder %s79, %s80
      %p91 = scmp.eq.s32.totalorder %s24, 0
      %p92 = por %p90, %p91
      %p93 = scmp.ne.s32.totalorder %s79, %s80
      %p94 = scmp.eq.s32.totalorder %s25, 1
      %p95 = por %p93, %p94
      %p97 = scmp.ne.s32.totalorder %s80, %s96
      %p98 = scmp.eq.s32.totalorder %s25, 0
      %p99 = por %p97, %p98
      %s100 = ssub.s32 %s19, %s26
      %p101 = scmp.eq.s32.totalorder %s100, 0
      %s103 = sadd.s32 %s102, 1
      %s104 = scalar_select %p101, %s102, %s103
      %p107 = pneg %p101
      %p108 = scmp.eq.s32.totalorder %s19, 1
      %p109 = por %p107, %p108
      %p110 = scmp.ne.s32.totalorder %s102, %s105
      %p111 = scmp.eq.s32.totalorder %s19, 0
      %p112 = por %p110, %p111
      %p113 = scmp.ne.s32.totalorder %s102, %s105
      %p114 = scmp.eq.s32.totalorder %s24, 1
      %p115 = por %p113, %p114
      %p116 = scmp.ne.s32.totalorder %s105, %s106
      %p117 = scmp.eq.s32.totalorder %s24, 0
      %p118 = por %p116, %p117
      %p119 = scmp.ne.s32.totalorder %s105, %s106
      %p120 = scmp.eq.s32.totalorder %s25, 1
      %p121 = por %p119, %p120
      %p123 = scmp.ne.s32.totalorder %s106, %s122
      %p124 = scmp.eq.s32.totalorder %s25, 0
      %p125 = por %p123, %p124
      %p126 = scmp.le.s32.totalorder 1, %s19
      %p127 = scmp.lt.s32.totalorder %s19, 3
      %p128 = pnand %p126, %p127
      %p129 = pneg %p128
      // Predicated region
      $region9: #{tpu_custom_call.1} parent=5 // pred_check
        _
      $region10: #{tpu_custom_call.1} parent=5 // pred_check_branch
        %131 = sbr.rel (%p128) target = $region12
      $region11: #{tpu_custom_call.1} parent=5 // pred_region
        %s132 = ssub.s32 %s19, 1
        // Predicated region
        $region13: #{tpu_custom_call.1} parent=11 // pred_check
          %p133 = pneg %p66
        $region14: #{tpu_custom_call.1} parent=11 // pred_check_branch
          %135 = sbr.rel (%p133) target = $region16
        $region15: #{tpu_custom_call.1} parent=11 // pred_region
          _
        $region16: #{tpu_custom_call.1} parent=11 // pred_fallthru
          _
      $region12: #{tpu_custom_call.1} parent=5 // pred_fallthru
        _
      %p136 = scmp.lt.s32.totalorder %s19, 2
      // Predicated region
      $region17: #{tpu_custom_call.1} parent=5 // pred_check
        %p137 = pneg %p136
      $region18: #{tpu_custom_call.1} parent=5 // pred_check_branch
        %139 = sbr.rel (%p137) target = $region20
      $region19: #{tpu_custom_call.1} parent=5 // pred_region
        // Predicated region
        $region21: #{tpu_custom_call.1} parent=19 // pred_check
          %p140 = pneg %p39
        $region22: #{tpu_custom_call.1} parent=19 // pred_check_branch
          %142 = sbr.rel (%p140) target = $region24
        $region23: #{tpu_custom_call.1} parent=19 // pred_region
          %s143 = sand.u32 %s29, 1
          %s144 = scalar_lea.sflag [#allocation3], %s143
          %s145 = sand.u32 %s29, 1
          %s146 = smul.addr %s145, 1024
          %s147 = scalar_lea.vmem [#allocation2], %s146
          %149 = vsyncadd %s144, 0
          %s150 = smul.addr %s19, 128
          %s151 = smul.addr %s150, 8
          %s152 = scalar_lea.hbm %s0, %s151
          %s153 = sshll.u32 %s152, 4
          %s154 = int_to_ptr.hbm [resolvable:$true] %s153
          %s155 = sshll.u32 %s147, 4
          %s156 = int_to_ptr.vmem [resolvable:$true] %s155
          %161 = dma.hbm_to_vmem [thread:$0]  %s154, 16384, %s156, %s144, 256, 256, 16
        $region24: #{tpu_custom_call.1} parent=19 // pred_fallthru
          _
      $region20: #{tpu_custom_call.1} parent=5 // pred_fallthru
        _
      %p162 = scmp.le.s32.totalorder 1, %s19
      %p163 = scmp.lt.s32.totalorder %s19, 3
      %p164 = pnand %p162, %p163
      %p165 = pneg %p164
      // Predicated region
      $region25: #{tpu_custom_call.1} parent=5 // pred_check
        _
      $region26: #{tpu_custom_call.1} parent=5 // pred_check_branch
        %167 = sbr.rel (%p164) target = $region28
      $region27: #{tpu_custom_call.1} parent=5 // pred_region
        %s168 = ssub.s32 %s19, 1
        %s169 = sand.u32 %s32, 1
        %s170 = scalar_lea.sflag [#allocation3], %s169
        %s171 = sand.u32 %s32, 1
        %s172 = smul.addr %s171, 1024
        %s173 = scalar_lea.vmem [#allocation2], %s172
        // Predicated region
        $region29: #{tpu_custom_call.1} parent=27 // pred_check
          %p174 = pneg %p45
        $region30: #{tpu_custom_call.1} parent=27 // pred_check_branch
          %176 = sbr.rel (%p174) target = $region32
        $region31: #{tpu_custom_call.1} parent=27 // pred_region
          %178 = dma.done %s170, 16384
        $region32: #{tpu_custom_call.1} parent=27 // pred_fallthru
          _
        %s179 = sand.u32 %s32, 1
        %s180 = scalar_lea.sflag [#allocation3], %s179
        %s181 = sand.u32 %s32, 1
        %s182 = smul.addr %s181, 1024
        %s183 = scalar_lea.vmem [#allocation2], %s182
        %p184 = pneg %p45
        %p185 = pneg %p42
        %p186 = pneg %p66
        %p187 = pneg %p63
        %p188 = pneg %p92
        %p189 = pneg %p89
        %s190 = sand.u32 %s79, 1
        %s191 = scalar_lea.sflag [#allocation4], %s190
        %s192 = sand.u32 %s79, 1
        %s193 = smul.addr %s192, 1024
        %s194 = scalar_lea.vmem [#allocation5], %s193
        %p195 = pneg %p118
        %p196 = pneg %p115
        %s197 = sand.u32 %s105, 1
        %s198 = scalar_lea.sflag [#allocation7], %s197
        %s199 = sand.u32 %s105, 1
        %s200 = smul.addr %s199, 2
        %s201 = scalar_lea.vmem [#allocation6], %s200
        %v202 = vld [vmem:[%s1] sm:$0xff]
        %v203 = vld [vmem:[%s1 + $0x8] sm:$0xff]
        %v204 = vld [vmem:[%s1 + $0x10] sm:$0xff]
        %v205 = vld [vmem:[%s1 + $0x18] sm:$0xff]
        %v206 = vld [vmem:[%s1 + $0x20] sm:$0xff]
        %v207 = vld [vmem:[%s1 + $0x28] sm:$0xff]
        %v208 = vld [vmem:[%s1 + $0x30] sm:$0xff]
        %v209 = vld [vmem:[%s1 + $0x38] sm:$0xff]
        %v210 = vld [vmem:[%s1 + $0x40] sm:$0xff]
        %v211 = vld [vmem:[%s1 + $0x48] sm:$0xff]
        %v212 = vld [vmem:[%s1 + $0x50] sm:$0xff]
        %v213 = vld [vmem:[%s1 + $0x58] sm:$0xff]
        %v214 = vld [vmem:[%s1 + $0x60] sm:$0xff]
        %v215 = vld [vmem:[%s1 + $0x68] sm:$0xff]
        %v216 = vld [vmem:[%s1 + $0x70] sm:$0xff]
        %v217 = vld [vmem:[%s1 + $0x78] sm:$0xff]
        %v218 = vld [vmem:[%s1 + $0x80] sm:$0xff]
        %v219 = vld [vmem:[%s1 + $0x88] sm:$0xff]
        %v220 = vld [vmem:[%s1 + $0x90] sm:$0xff]
        %v221 = vld [vmem:[%s1 + $0x98] sm:$0xff]
        %v222 = vld [vmem:[%s1 + $0xa0] sm:$0xff]
        %v223 = vld [vmem:[%s1 + $0xa8] sm:$0xff]
        %v224 = vld [vmem:[%s1 + $0xb0] sm:$0xff]
        %v225 = vld [vmem:[%s1 + $0xb8] sm:$0xff]
        %v226 = vld [vmem:[%s1 + $0xc0] sm:$0xff]
        %v227 = vld [vmem:[%s1 + $0xc8] sm:$0xff]
        %v228 = vld [vmem:[%s1 + $0xd0] sm:$0xff]
        %v229 = vld [vmem:[%s1 + $0xd8] sm:$0xff]
        %v230 = vld [vmem:[%s1 + $0xe0] sm:$0xff]
        %v231 = vld [vmem:[%s1 + $0xe8] sm:$0xff]
        %v232 = vld [vmem:[%s1 + $0xf0] sm:$0xff]
        %v233 = vld [vmem:[%s1 + $0xf8] sm:$0xff]
        %v234 = vld [vmem:[%s1 + $0x100] sm:$0xff]
        %v235 = vld [vmem:[%s1 + $0x108] sm:$0xff]
        %v236 = vld [vmem:[%s1 + $0x110] sm:$0xff]
        %v237 = vld [vmem:[%s1 + $0x118] sm:$0xff]
        %v238 = vld [vmem:[%s1 + $0x120] sm:$0xff]
        %v239 = vld [vmem:[%s1 + $0x128] sm:$0xff]
        %v240 = vld [vmem:[%s1 + $0x130] sm:$0xff]
        %v241 = vld [vmem:[%s1 + $0x138] sm:$0xff]
        %v242 = vld [vmem:[%s1 + $0x140] sm:$0xff]
        %v243 = vld [vmem:[%s1 + $0x148] sm:$0xff]
        %v244 = vld [vmem:[%s1 + $0x150] sm:$0xff]
        %v245 = vld [vmem:[%s1 + $0x158] sm:$0xff]
        %v246 = vld [vmem:[%s1 + $0x160] sm:$0xff]
        %v247 = vld [vmem:[%s1 + $0x168] sm:$0xff]
        %v248 = vld [vmem:[%s1 + $0x170] sm:$0xff]
        %v249 = vld [vmem:[%s1 + $0x178] sm:$0xff]
        %v250 = vld [vmem:[%s1 + $0x180] sm:$0xff]
        %v251 = vld [vmem:[%s1 + $0x188] sm:$0xff]
        %v252 = vld [vmem:[%s1 + $0x190] sm:$0xff]
        %v253 = vld [vmem:[%s1 + $0x198] sm:$0xff]
        %v254 = vld [vmem:[%s1 + $0x1a0] sm:$0xff]
        %v255 = vld [vmem:[%s1 + $0x1a8] sm:$0xff]
        %v256 = vld [vmem:[%s1 + $0x1b0] sm:$0xff]
        %v257 = vld [vmem:[%s1 + $0x1b8] sm:$0xff]
        %v258 = vld [vmem:[%s1 + $0x1c0] sm:$0xff]
        %v259 = vld [vmem:[%s1 + $0x1c8] sm:$0xff]
        %v260 = vld [vmem:[%s1 + $0x1d0] sm:$0xff]
        %v261 = vld [vmem:[%s1 + $0x1d8] sm:$0xff]
        %v262 = vld [vmem:[%s1 + $0x1e0] sm:$0xff]
        %v263 = vld [vmem:[%s1 + $0x1e8] sm:$0xff]
        %v264 = vld [vmem:[%s1 + $0x1f0] sm:$0xff]
        %v265 = vld [vmem:[%s1 + $0x1f8] sm:$0xff]
        %v266 = vld [vmem:[%s173] sm:$0xff]
        %v267 = vld [vmem:[%s173 + $0x8] sm:$0xff]
        %v268 = vld [vmem:[%s173 + $0x10] sm:$0xff]
        %v269 = vld [vmem:[%s173 + $0x18] sm:$0xff]
        %v270 = vld [vmem:[%s173 + $0x20] sm:$0xff]
        %v271 = vld [vmem:[%s173 + $0x28] sm:$0xff]
        %v272 = vld [vmem:[%s173 + $0x30] sm:$0xff]
        %v273 = vld [vmem:[%s173 + $0x38] sm:$0xff]
        %v274 = vld [vmem:[%s173 + $0x40] sm:$0xff]
        %v275 = vld [vmem:[%s173 + $0x48] sm:$0xff]
        %v276 = vld [vmem:[%s173 + $0x50] sm:$0xff]
        %v277 = vld [vmem:[%s173 + $0x58] sm:$0xff]
        %v278 = vld [vmem:[%s173 + $0x60] sm:$0xff]
        %v279 = vld [vmem:[%s173 + $0x68] sm:$0xff]
        %v280 = vld [vmem:[%s173 + $0x70] sm:$0xff]
        %v281 = vld [vmem:[%s173 + $0x78] sm:$0xff]
        %v282 = vld [vmem:[%s173 + $0x80] sm:$0xff]
        %v283 = vld [vmem:[%s173 + $0x88] sm:$0xff]
        %v284 = vld [vmem:[%s173 + $0x90] sm:$0xff]
        %v285 = vld [vmem:[%s173 + $0x98] sm:$0xff]
        %v286 = vld [vmem:[%s173 + $0xa0] sm:$0xff]
        %v287 = vld [vmem:[%s173 + $0xa8] sm:$0xff]
        %v288 = vld [vmem:[%s173 + $0xb0] sm:$0xff]
        %v289 = vld [vmem:[%s173 + $0xb8] sm:$0xff]
        %v290 = vld [vmem:[%s173 + $0xc0] sm:$0xff]
        %v291 = vld [vmem:[%s173 + $0xc8] sm:$0xff]
        %v292 = vld [vmem:[%s173 + $0xd0] sm:$0xff]
        %v293 = vld [vmem:[%s173 + $0xd8] sm:$0xff]
        %v294 = vld [vmem:[%s173 + $0xe0] sm:$0xff]
        %v295 = vld [vmem:[%s173 + $0xe8] sm:$0xff]
        %v296 = vld [vmem:[%s173 + $0xf0] sm:$0xff]
        %v297 = vld [vmem:[%s173 + $0xf8] sm:$0xff]
        %v298 = vld [vmem:[%s173 + $0x100] sm:$0xff]
        %v299 = vld [vmem:[%s173 + $0x108] sm:$0xff]
        %v300 = vld [vmem:[%s173 + $0x110] sm:$0xff]
        %v301 = vld [vmem:[%s173 + $0x118] sm:$0xff]
        %v302 = vld [vmem:[%s173 + $0x120] sm:$0xff]
        %v303 = vld [vmem:[%s173 + $0x128] sm:$0xff]
        %v304 = vld [vmem:[%s173 + $0x130] sm:$0xff]
        %v305 = vld [vmem:[%s173 + $0x138] sm:$0xff]
        %v306 = vld [vmem:[%s173 + $0x140] sm:$0xff]
        %v307 = vld [vmem:[%s173 + $0x148] sm:$0xff]
        %v308 = vld [vmem:[%s173 + $0x150] sm:$0xff]
        %v309 = vld [vmem:[%s173 + $0x158] sm:$0xff]
        %v310 = vld [vmem:[%s173 + $0x160] sm:$0xff]
        %v311 = vld [vmem:[%s173 + $0x168] sm:$0xff]
        %v312 = vld [vmem:[%s173 + $0x170] sm:$0xff]
        %v313 = vld [vmem:[%s173 + $0x178] sm:$0xff]
        %v314 = vld [vmem:[%s173 + $0x180] sm:$0xff]
        %v315 = vld [vmem:[%s173 + $0x188] sm:$0xff]
        %v316 = vld [vmem:[%s173 + $0x190] sm:$0xff]
        %v317 = vld [vmem:[%s173 + $0x198] sm:$0xff]
        %v318 = vld [vmem:[%s173 + $0x1a0] sm:$0xff]
        %v319 = vld [vmem:[%s173 + $0x1a8] sm:$0xff]
        %v320 = vld [vmem:[%s173 + $0x1b0] sm:$0xff]
        %v321 = vld [vmem:[%s173 + $0x1b8] sm:$0xff]
        %v322 = vld [vmem:[%s173 + $0x1c0] sm:$0xff]
        %v323 = vld [vmem:[%s173 + $0x1c8] sm:$0xff]
        %v324 = vld [vmem:[%s173 + $0x1d0] sm:$0xff]
        %v325 = vld [vmem:[%s173 + $0x1d8] sm:$0xff]
        %v326 = vld [vmem:[%s173 + $0x1e0] sm:$0xff]
        %v327 = vld [vmem:[%s173 + $0x1e8] sm:$0xff]
        %v328 = vld [vmem:[%s173 + $0x1f0] sm:$0xff]
        %v329 = vld [vmem:[%s173 + $0x1f8] sm:$0xff]
        %v330 = vld [vmem:[%s173 + $0x200] sm:$0xff]
        %v331 = vld [vmem:[%s173 + $0x208] sm:$0xff]
        %v332 = vld [vmem:[%s173 + $0x210] sm:$0xff]
        %v333 = vld [vmem:[%s173 + $0x218] sm:$0xff]
        %v334 = vld [vmem:[%s173 + $0x220] sm:$0xff]
        %v335 = vld [vmem:[%s173 + $0x228] sm:$0xff]
        %v336 = vld [vmem:[%s173 + $0x230] sm:$0xff]
        %v337 = vld [vmem:[%s173 + $0x238] sm:$0xff]
        %v338 = vld [vmem:[%s173 + $0x240] sm:$0xff]
        %v339 = vld [vmem:[%s173 + $0x248] sm:$0xff]
        %v340 = vld [vmem:[%s173 + $0x250] sm:$0xff]
        %v341 = vld [vmem:[%s173 + $0x258] sm:$0xff]
        %v342 = vld [vmem:[%s173 + $0x260] sm:$0xff]
        %v343 = vld [vmem:[%s173 + $0x268] sm:$0xff]
        %v344 = vld [vmem:[%s173 + $0x270] sm:$0xff]
        %v345 = vld [vmem:[%s173 + $0x278] sm:$0xff]
        %v346 = vld [vmem:[%s173 + $0x280] sm:$0xff]
        %v347 = vld [vmem:[%s173 + $0x288] sm:$0xff]
        %v348 = vld [vmem:[%s173 + $0x290] sm:$0xff]
        %v349 = vld [vmem:[%s173 + $0x298] sm:$0xff]
        %v350 = vld [vmem:[%s173 + $0x2a0] sm:$0xff]
        %v351 = vld [vmem:[%s173 + $0x2a8] sm:$0xff]
        %v352 = vld [vmem:[%s173 + $0x2b0] sm:$0xff]
        %v353 = vld [vmem:[%s173 + $0x2b8] sm:$0xff]
        %v354 = vld [vmem:[%s173 + $0x2c0] sm:$0xff]
        %v355 = vld [vmem:[%s173 + $0x2c8] sm:$0xff]
        %v356 = vld [vmem:[%s173 + $0x2d0] sm:$0xff]
        %v357 = vld [vmem:[%s173 + $0x2d8] sm:$0xff]
        %v358 = vld [vmem:[%s173 + $0x2e0] sm:$0xff]
        %v359 = vld [vmem:[%s173 + $0x2e8] sm:$0xff]
        %v360 = vld [vmem:[%s173 + $0x2f0] sm:$0xff]
        %v361 = vld [vmem:[%s173 + $0x2f8] sm:$0xff]
        %v362 = vld [vmem:[%s173 + $0x300] sm:$0xff]
        %v363 = vld [vmem:[%s173 + $0x308] sm:$0xff]
        %v364 = vld [vmem:[%s173 + $0x310] sm:$0xff]
        %v365 = vld [vmem:[%s173 + $0x318] sm:$0xff]
        %v366 = vld [vmem:[%s173 + $0x320] sm:$0xff]
        %v367 = vld [vmem:[%s173 + $0x328] sm:$0xff]
        %v368 = vld [vmem:[%s173 + $0x330] sm:$0xff]
        %v369 = vld [vmem:[%s173 + $0x338] sm:$0xff]
        %v370 = vld [vmem:[%s173 + $0x340] sm:$0xff]
        %v371 = vld [vmem:[%s173 + $0x348] sm:$0xff]
        %v372 = vld [vmem:[%s173 + $0x350] sm:$0xff]
        %v373 = vld [vmem:[%s173 + $0x358] sm:$0xff]
        %v374 = vld [vmem:[%s173 + $0x360] sm:$0xff]
        %v375 = vld [vmem:[%s173 + $0x368] sm:$0xff]
        %v376 = vld [vmem:[%s173 + $0x370] sm:$0xff]
        %v377 = vld [vmem:[%s173 + $0x378] sm:$0xff]
        %v378 = vld [vmem:[%s173 + $0x380] sm:$0xff]
        %v379 = vld [vmem:[%s173 + $0x388] sm:$0xff]
        %v380 = vld [vmem:[%s173 + $0x390] sm:$0xff]
        %v381 = vld [vmem:[%s173 + $0x398] sm:$0xff]
        %v382 = vld [vmem:[%s173 + $0x3a0] sm:$0xff]
        %v383 = vld [vmem:[%s173 + $0x3a8] sm:$0xff]
        %v384 = vld [vmem:[%s173 + $0x3b0] sm:$0xff]
        %v385 = vld [vmem:[%s173 + $0x3b8] sm:$0xff]
        %v386 = vld [vmem:[%s173 + $0x3c0] sm:$0xff]
        %v387 = vld [vmem:[%s173 + $0x3c8] sm:$0xff]
        %v388 = vld [vmem:[%s173 + $0x3d0] sm:$0xff]
        %v389 = vld [vmem:[%s173 + $0x3d8] sm:$0xff]
        %v390 = vld [vmem:[%s173 + $0x3e0] sm:$0xff]
        %v391 = vld [vmem:[%s173 + $0x3e8] sm:$0xff]
        %v392 = vld [vmem:[%s173 + $0x3f0] sm:$0xff]
        %v393 = vld [vmem:[%s173 + $0x3f8] sm:$0xff]
        %395 = vset.pattern.permute.xlu0 0
        %396 = vperm.xlu0 %395, %v202
        %v397 = vpop.permute.xlu0 %396
        %400 = vset.pattern.permute.xlu0 0
        %401 = vperm.xlu0 %400, %v203
        %v402 = vpop.permute.xlu0 %401
        %405 = vset.pattern.permute.xlu0 0
        %406 = vperm.xlu0 %405, %v204
        %v407 = vpop.permute.xlu0 %406
        %410 = vset.pattern.permute.xlu0 0
        %411 = vperm.xlu0 %410, %v205
        %v412 = vpop.permute.xlu0 %411
        %415 = vset.pattern.permute.xlu0 0
        %416 = vperm.xlu0 %415, %v206
        %v417 = vpop.permute.xlu0 %416
        %420 = vset.pattern.permute.xlu0 0
        %421 = vperm.xlu0 %420, %v207
        %v422 = vpop.permute.xlu0 %421
        %425 = vset.pattern.permute.xlu0 0
        %426 = vperm.xlu0 %425, %v208
        %v427 = vpop.permute.xlu0 %426
        %430 = vset.pattern.permute.xlu0 0
        %431 = vperm.xlu0 %430, %v209
        %v432 = vpop.permute.xlu0 %431
        %435 = vset.pattern.permute.xlu0 0
        %436 = vperm.xlu0 %435, %v210
        %v437 = vpop.permute.xlu0 %436
        %440 = vset.pattern.permute.xlu0 0
        %441 = vperm.xlu0 %440, %v211
        %v442 = vpop.permute.xlu0 %441
        %445 = vset.pattern.permute.xlu0 0
        %446 = vperm.xlu0 %445, %v212
        %v447 = vpop.permute.xlu0 %446
        %450 = vset.pattern.permute.xlu0 0
        %451 = vperm.xlu0 %450, %v213
        %v452 = vpop.permute.xlu0 %451
        %455 = vset.pattern.permute.xlu0 0
        %456 = vperm.xlu0 %455, %v214
        %v457 = vpop.permute.xlu0 %456
        %460 = vset.pattern.permute.xlu0 0
        %461 = vperm.xlu0 %460, %v215
        %v462 = vpop.permute.xlu0 %461
        %465 = vset.pattern.permute.xlu0 0
        %466 = vperm.xlu0 %465, %v216
        %v467 = vpop.permute.xlu0 %466
        %470 = vset.pattern.permute.xlu0 0
        %471 = vperm.xlu0 %470, %v217
        %v472 = vpop.permute.xlu0 %471
        %475 = vset.pattern.permute.xlu0 0
        %476 = vperm.xlu0 %475, %v218
        %v477 = vpop.permute.xlu0 %476
        %480 = vset.pattern.permute.xlu0 0
        %481 = vperm.xlu0 %480, %v219
        %v482 = vpop.permute.xlu0 %481
        %485 = vset.pattern.permute.xlu0 0
        %486 = vperm.xlu0 %485, %v220
        %v487 = vpop.permute.xlu0 %486
        %490 = vset.pattern.permute.xlu0 0
        %491 = vperm.xlu0 %490, %v221
        %v492 = vpop.permute.xlu0 %491
        %495 = vset.pattern.permute.xlu0 0
        %496 = vperm.xlu0 %495, %v222
        %v497 = vpop.permute.xlu0 %496
        %500 = vset.pattern.permute.xlu0 0
        %501 = vperm.xlu0 %500, %v223
        %v502 = vpop.permute.xlu0 %501
        %505 = vset.pattern.permute.xlu0 0
        %506 = vperm.xlu0 %505, %v224
        %v507 = vpop.permute.xlu0 %506
        %510 = vset.pattern.permute.xlu0 0
        %511 = vperm.xlu0 %510, %v225
        %v512 = vpop.permute.xlu0 %511
        %515 = vset.pattern.permute.xlu0 0
        %516 = vperm.xlu0 %515, %v226
        %v517 = vpop.permute.xlu0 %516
        %520 = vset.pattern.permute.xlu0 0
        %521 = vperm.xlu0 %520, %v227
        %v522 = vpop.permute.xlu0 %521
        %525 = vset.pattern.permute.xlu0 0
        %526 = vperm.xlu0 %525, %v228
        %v527 = vpop.permute.xlu0 %526
        %530 = vset.pattern.permute.xlu0 0
        %531 = vperm.xlu0 %530, %v229
        %v532 = vpop.permute.xlu0 %531
        %535 = vset.pattern.permute.xlu0 0
        %536 = vperm.xlu0 %535, %v230
        %v537 = vpop.permute.xlu0 %536
        %540 = vset.pattern.permute.xlu0 0
        %541 = vperm.xlu0 %540, %v231
        %v542 = vpop.permute.xlu0 %541
        %545 = vset.pattern.permute.xlu0 0
        %546 = vperm.xlu0 %545, %v232
        %v547 = vpop.permute.xlu0 %546
        %550 = vset.pattern.permute.xlu0 0
        %551 = vperm.xlu0 %550, %v233
        %v552 = vpop.permute.xlu0 %551
        %555 = vset.pattern.permute.xlu0 0
        %556 = vperm.xlu0 %555, %v234
        %v557 = vpop.permute.xlu0 %556
        %560 = vset.pattern.permute.xlu0 0
        %561 = vperm.xlu0 %560, %v235
        %v562 = vpop.permute.xlu0 %561
        %565 = vset.pattern.permute.xlu0 0
        %566 = vperm.xlu0 %565, %v236
        %v567 = vpop.permute.xlu0 %566
        %570 = vset.pattern.permute.xlu0 0
        %571 = vperm.xlu0 %570, %v237
        %v572 = vpop.permute.xlu0 %571
        %575 = vset.pattern.permute.xlu0 0
        %576 = vperm.xlu0 %575, %v238
        %v577 = vpop.permute.xlu0 %576
        %580 = vset.pattern.permute.xlu0 0
        %581 = vperm.xlu0 %580, %v239
        %v582 = vpop.permute.xlu0 %581
        %585 = vset.pattern.permute.xlu0 0
        %586 = vperm.xlu0 %585, %v240
        %v587 = vpop.permute.xlu0 %586
        %590 = vset.pattern.permute.xlu0 0
        %591 = vperm.xlu0 %590, %v241
        %v592 = vpop.permute.xlu0 %591
        %595 = vset.pattern.permute.xlu0 0
        %596 = vperm.xlu0 %595, %v242
        %v597 = vpop.permute.xlu0 %596
        %600 = vset.pattern.permute.xlu0 0
        %601 = vperm.xlu0 %600, %v243
        %v602 = vpop.permute.xlu0 %601
        %605 = vset.pattern.permute.xlu0 0
        %606 = vperm.xlu0 %605, %v244
        %v607 = vpop.permute.xlu0 %606
        %610 = vset.pattern.permute.xlu0 0
        %611 = vperm.xlu0 %610, %v245
        %v612 = vpop.permute.xlu0 %611
        %615 = vset.pattern.permute.xlu0 0
        %616 = vperm.xlu0 %615, %v246
        %v617 = vpop.permute.xlu0 %616
        %620 = vset.pattern.permute.xlu0 0
        %621 = vperm.xlu0 %620, %v247
        %v622 = vpop.permute.xlu0 %621
        %625 = vset.pattern.permute.xlu0 0
        %626 = vperm.xlu0 %625, %v248
        %v627 = vpop.permute.xlu0 %626
        %630 = vset.pattern.permute.xlu0 0
        %631 = vperm.xlu0 %630, %v249
        %v632 = vpop.permute.xlu0 %631
        %635 = vset.pattern.permute.xlu0 0
        %636 = vperm.xlu0 %635, %v250
        %v637 = vpop.permute.xlu0 %636
        %640 = vset.pattern.permute.xlu0 0
        %641 = vperm.xlu0 %640, %v251
        %v642 = vpop.permute.xlu0 %641
        %645 = vset.pattern.permute.xlu0 0
        %646 = vperm.xlu0 %645, %v252
        %v647 = vpop.permute.xlu0 %646
        %650 = vset.pattern.permute.xlu0 0
        %651 = vperm.xlu0 %650, %v253
        %v652 = vpop.permute.xlu0 %651
        %655 = vset.pattern.permute.xlu0 0
        %656 = vperm.xlu0 %655, %v254
        %v657 = vpop.permute.xlu0 %656
        %660 = vset.pattern.permute.xlu0 0
        %661 = vperm.xlu0 %660, %v255
        %v662 = vpop.permute.xlu0 %661
        %665 = vset.pattern.permute.xlu0 0
        %666 = vperm.xlu0 %665, %v256
        %v667 = vpop.permute.xlu0 %666
        %670 = vset.pattern.permute.xlu0 0
        %671 = vperm.xlu0 %670, %v257
        %v672 = vpop.permute.xlu0 %671
        %675 = vset.pattern.permute.xlu0 0
        %676 = vperm.xlu0 %675, %v258
        %v677 = vpop.permute.xlu0 %676
        %680 = vset.pattern.permute.xlu0 0
        %681 = vperm.xlu0 %680, %v259
        %v682 = vpop.permute.xlu0 %681
        %685 = vset.pattern.permute.xlu0 0
        %686 = vperm.xlu0 %685, %v260
        %v687 = vpop.permute.xlu0 %686
        %690 = vset.pattern.permute.xlu0 0
        %691 = vperm.xlu0 %690, %v261
        %v692 = vpop.permute.xlu0 %691
        %695 = vset.pattern.permute.xlu0 0
        %696 = vperm.xlu0 %695, %v262
        %v697 = vpop.permute.xlu0 %696
        %700 = vset.pattern.permute.xlu0 0
        %701 = vperm.xlu0 %700, %v263
        %v702 = vpop.permute.xlu0 %701
        %705 = vset.pattern.permute.xlu0 0
        %706 = vperm.xlu0 %705, %v264
        %v707 = vpop.permute.xlu0 %706
        %710 = vset.pattern.permute.xlu0 0
        %711 = vperm.xlu0 %710, %v265
        %v712 = vpop.permute.xlu0 %711
        %v714 = vmul.f32 %v266, %v397
        %v715 = vmul.f32 %v267, %v397
        %v716 = vmul.f32 %v268, %v402
        %v717 = vmul.f32 %v269, %v402
        %v718 = vmul.f32 %v270, %v407
        %v719 = vmul.f32 %v271, %v407
        %v720 = vmul.f32 %v272, %v412
        %v721 = vmul.f32 %v273, %v412
        %v722 = vmul.f32 %v274, %v417
        %v723 = vmul.f32 %v275, %v417
        %v724 = vmul.f32 %v276, %v422
        %v725 = vmul.f32 %v277, %v422
        %v726 = vmul.f32 %v278, %v427
        %v727 = vmul.f32 %v279, %v427
        %v728 = vmul.f32 %v280, %v432
        %v729 = vmul.f32 %v281, %v432
        %v730 = vmul.f32 %v282, %v437
        %v731 = vmul.f32 %v283, %v437
        %v732 = vmul.f32 %v284, %v442
        %v733 = vmul.f32 %v285, %v442
        %v734 = vmul.f32 %v286, %v447
        %v735 = vmul.f32 %v287, %v447
        %v736 = vmul.f32 %v288, %v452
        %v737 = vmul.f32 %v289, %v452
        %v738 = vmul.f32 %v290, %v457
        %v739 = vmul.f32 %v291, %v457
        %v740 = vmul.f32 %v292, %v462
        %v741 = vmul.f32 %v293, %v462
        %v742 = vmul.f32 %v294, %v467
        %v743 = vmul.f32 %v295, %v467
        %v744 = vmul.f32 %v296, %v472
        %v745 = vmul.f32 %v297, %v472
        %v746 = vmul.f32 %v298, %v477
        %v747 = vmul.f32 %v299, %v477
        %v748 = vmul.f32 %v300, %v482
        %v749 = vmul.f32 %v301, %v482
        %v750 = vmul.f32 %v302, %v487
        %v751 = vmul.f32 %v303, %v487
        %v752 = vmul.f32 %v304, %v492
        %v753 = vmul.f32 %v305, %v492
        %v754 = vmul.f32 %v306, %v497
        %v755 = vmul.f32 %v307, %v497
        %v756 = vmul.f32 %v308, %v502
        %v757 = vmul.f32 %v309, %v502
        %v758 = vmul.f32 %v310, %v507
        %v759 = vmul.f32 %v311, %v507
        %v760 = vmul.f32 %v312, %v512
        %v761 = vmul.f32 %v313, %v512
        %v762 = vmul.f32 %v314, %v517
        %v763 = vmul.f32 %v315, %v517
        %v764 = vmul.f32 %v316, %v522
        %v765 = vmul.f32 %v317, %v522
        %v766 = vmul.f32 %v318, %v527
        %v767 = vmul.f32 %v319, %v527
        %v768 = vmul.f32 %v320, %v532
        %v769 = vmul.f32 %v321, %v532
        %v770 = vmul.f32 %v322, %v537
        %v771 = vmul.f32 %v323, %v537
        %v772 = vmul.f32 %v324, %v542
        %v773 = vmul.f32 %v325, %v542
        %v774 = vmul.f32 %v326, %v547
        %v775 = vmul.f32 %v327, %v547
        %v776 = vmul.f32 %v328, %v552
        %v777 = vmul.f32 %v329, %v552
        %v778 = vmul.f32 %v330, %v557
        %v779 = vmul.f32 %v331, %v557
        %v780 = vmul.f32 %v332, %v562
        %v781 = vmul.f32 %v333, %v562
        %v782 = vmul.f32 %v334, %v567
        %v783 = vmul.f32 %v335, %v567
        %v784 = vmul.f32 %v336, %v572
        %v785 = vmul.f32 %v337, %v572
        %v786 = vmul.f32 %v338, %v577
        %v787 = vmul.f32 %v339, %v577
        %v788 = vmul.f32 %v340, %v582
        %v789 = vmul.f32 %v341, %v582
        %v790 = vmul.f32 %v342, %v587
        %v791 = vmul.f32 %v343, %v587
        %v792 = vmul.f32 %v344, %v592
        %v793 = vmul.f32 %v345, %v592
        %v794 = vmul.f32 %v346, %v597
        %v795 = vmul.f32 %v347, %v597
        %v796 = vmul.f32 %v348, %v602
        %v797 = vmul.f32 %v349, %v602
        %v798 = vmul.f32 %v350, %v607
        %v799 = vmul.f32 %v351, %v607
        %v800 = vmul.f32 %v352, %v612
        %v801 = vmul.f32 %v353, %v612
        %v802 = vmul.f32 %v354, %v617
        %v803 = vmul.f32 %v355, %v617
        %v804 = vmul.f32 %v356, %v622
        %v805 = vmul.f32 %v357, %v622
        %v806 = vmul.f32 %v358, %v627
        %v807 = vmul.f32 %v359, %v627
        %v808 = vmul.f32 %v360, %v632
        %v809 = vmul.f32 %v361, %v632
        %v810 = vmul.f32 %v362, %v637
        %v811 = vmul.f32 %v363, %v637
        %v812 = vmul.f32 %v364, %v642
        %v813 = vmul.f32 %v365, %v642
        %v814 = vmul.f32 %v366, %v647
        %v815 = vmul.f32 %v367, %v647
        %v816 = vmul.f32 %v368, %v652
        %v817 = vmul.f32 %v369, %v652
        %v818 = vmul.f32 %v370, %v657
        %v819 = vmul.f32 %v371, %v657
        %v820 = vmul.f32 %v372, %v662
        %v821 = vmul.f32 %v373, %v662
        %v822 = vmul.f32 %v374, %v667
        %v823 = vmul.f32 %v375, %v667
        %v824 = vmul.f32 %v376, %v672
        %v825 = vmul.f32 %v377, %v672
        %v826 = vmul.f32 %v378, %v677
        %v827 = vmul.f32 %v379, %v677
        %v828 = vmul.f32 %v380, %v682
        %v829 = vmul.f32 %v381, %v682
        %v830 = vmul.f32 %v382, %v687
        %v831 = vmul.f32 %v383, %v687
        %v832 = vmul.f32 %v384, %v692
        %v833 = vmul.f32 %v385, %v692
        %v834 = vmul.f32 %v386, %v697
        %v835 = vmul.f32 %v387, %v697
        %v836 = vmul.f32 %v388, %v702
        %v837 = vmul.f32 %v389, %v702
        %v838 = vmul.f32 %v390, %v707
        %v839 = vmul.f32 %v391, %v707
        %v840 = vmul.f32 %v392, %v712
        %v841 = vmul.f32 %v393, %v712
        %v842 = vadd.f32 %v714, %v716
        %v843 = vadd.f32 %v842, %v718
        %v844 = vadd.f32 %v843, %v720
        %v845 = vadd.f32 %v844, %v722
        %v846 = vadd.f32 %v845, %v724
        %v847 = vadd.f32 %v846, %v726
        %v848 = vadd.f32 %v847, %v728
        %v849 = vadd.f32 %v848, %v730
        %v850 = vadd.f32 %v849, %v732
        %v851 = vadd.f32 %v850, %v734
        %v852 = vadd.f32 %v851, %v736
        %v853 = vadd.f32 %v852, %v738
        %v854 = vadd.f32 %v853, %v740
        %v855 = vadd.f32 %v854, %v742
        %v856 = vadd.f32 %v855, %v744
        %v857 = vadd.f32 %v856, %v746
        %v858 = vadd.f32 %v857, %v748
        %v859 = vadd.f32 %v858, %v750
        %v860 = vadd.f32 %v859, %v752
        %v861 = vadd.f32 %v860, %v754
        %v862 = vadd.f32 %v861, %v756
        %v863 = vadd.f32 %v862, %v758
        %v864 = vadd.f32 %v863, %v760
        %v865 = vadd.f32 %v864, %v762
        %v866 = vadd.f32 %v865, %v764
        %v867 = vadd.f32 %v866, %v766
        %v868 = vadd.f32 %v867, %v768
        %v869 = vadd.f32 %v868, %v770
        %v870 = vadd.f32 %v869, %v772
        %v871 = vadd.f32 %v870, %v774
        %v872 = vadd.f32 %v871, %v776
        %v873 = vadd.f32 %v872, %v778
        %v874 = vadd.f32 %v873, %v780
        %v875 = vadd.f32 %v874, %v782
        %v876 = vadd.f32 %v875, %v784
        %v877 = vadd.f32 %v876, %v786
        %v878 = vadd.f32 %v877, %v788
        %v879 = vadd.f32 %v878, %v790
        %v880 = vadd.f32 %v879, %v792
        %v881 = vadd.f32 %v880, %v794
        %v882 = vadd.f32 %v881, %v796
        %v883 = vadd.f32 %v882, %v798
        %v884 = vadd.f32 %v883, %v800
        %v885 = vadd.f32 %v884, %v802
        %v886 = vadd.f32 %v885, %v804
        %v887 = vadd.f32 %v886, %v806
        %v888 = vadd.f32 %v887, %v808
        %v889 = vadd.f32 %v888, %v810
        %v890 = vadd.f32 %v889, %v812
        %v891 = vadd.f32 %v890, %v814
        %v892 = vadd.f32 %v891, %v816
        %v893 = vadd.f32 %v892, %v818
        %v894 = vadd.f32 %v893, %v820
        %v895 = vadd.f32 %v894, %v822
        %v896 = vadd.f32 %v895, %v824
        %v897 = vadd.f32 %v896, %v826
        %v898 = vadd.f32 %v897, %v828
        %v899 = vadd.f32 %v898, %v830
        %v900 = vadd.f32 %v899, %v832
        %v901 = vadd.f32 %v900, %v834
        %v902 = vadd.f32 %v901, %v836
        %v903 = vadd.f32 %v902, %v838
        %v904 = vadd.f32 %v903, %v840
        %v905 = vrot.slane %v904, 4
        %v906 = vadd.f32 %v904, %v905
        %v907 = vrot.slane %v906, 2
        %v908 = vadd.f32 %v906, %v907
        %v909 = vrot.slane %v908, 1
        %v910 = vadd.f32 %v908, %v909
        %v911 = vadd.f32 %v715, %v717
        %v912 = vadd.f32 %v911, %v719
        %v913 = vadd.f32 %v912, %v721
        %v914 = vadd.f32 %v913, %v723
        %v915 = vadd.f32 %v914, %v725
        %v916 = vadd.f32 %v915, %v727
        %v917 = vadd.f32 %v916, %v729
        %v918 = vadd.f32 %v917, %v731
        %v919 = vadd.f32 %v918, %v733
        %v920 = vadd.f32 %v919, %v735
        %v921 = vadd.f32 %v920, %v737
        %v922 = vadd.f32 %v921, %v739
        %v923 = vadd.f32 %v922, %v741
        %v924 = vadd.f32 %v923, %v743
        %v925 = vadd.f32 %v924, %v745
        %v926 = vadd.f32 %v925, %v747
        %v927 = vadd.f32 %v926, %v749
        %v928 = vadd.f32 %v927, %v751
        %v929 = vadd.f32 %v928, %v753
        %v930 = vadd.f32 %v929, %v755
        %v931 = vadd.f32 %v930, %v757
        %v932 = vadd.f32 %v931, %v759
        %v933 = vadd.f32 %v932, %v761
        %v934 = vadd.f32 %v933, %v763
        %v935 = vadd.f32 %v934, %v765
        %v936 = vadd.f32 %v935, %v767
        %v937 = vadd.f32 %v936, %v769
        %v938 = vadd.f32 %v937, %v771
        %v939 = vadd.f32 %v938, %v773
        %v940 = vadd.f32 %v939, %v775
        %v941 = vadd.f32 %v940, %v777
        %v942 = vadd.f32 %v941, %v779
        %v943 = vadd.f32 %v942, %v781
        %v944 = vadd.f32 %v943, %v783
        %v945 = vadd.f32 %v944, %v785
        %v946 = vadd.f32 %v945, %v787
        %v947 = vadd.f32 %v946, %v789
        %v948 = vadd.f32 %v947, %v791
        %v949 = vadd.f32 %v948, %v793
        %v950 = vadd.f32 %v949, %v795
        %v951 = vadd.f32 %v950, %v797
        %v952 = vadd.f32 %v951, %v799
        %v953 = vadd.f32 %v952, %v801
        %v954 = vadd.f32 %v953, %v803
        %v955 = vadd.f32 %v954, %v805
        %v956 = vadd.f32 %v955, %v807
        %v957 = vadd.f32 %v956, %v809
        %v958 = vadd.f32 %v957, %v811
        %v959 = vadd.f32 %v958, %v813
        %v960 = vadd.f32 %v959, %v815
        %v961 = vadd.f32 %v960, %v817
        %v962 = vadd.f32 %v961, %v819
        %v963 = vadd.f32 %v962, %v821
        %v964 = vadd.f32 %v963, %v823
        %v965 = vadd.f32 %v964, %v825
        %v966 = vadd.f32 %v965, %v827
        %v967 = vadd.f32 %v966, %v829
        %v968 = vadd.f32 %v967, %v831
        %v969 = vadd.f32 %v968, %v833
        %v970 = vadd.f32 %v969, %v835
        %v971 = vadd.f32 %v970, %v837
        %v972 = vadd.f32 %v971, %v839
        %v973 = vadd.f32 %v972, %v841
        %v974 = vrot.slane %v973, 4
        %v975 = vadd.f32 %v973, %v974
        %v976 = vrot.slane %v975, 2
        %v977 = vadd.f32 %v975, %v976
        %v978 = vrot.slane %v977, 1
        %v979 = vadd.f32 %v977, %v978
        %v980 = vmax.f32 %v910, %v979
        %981 = vmax.xlane.f32.xlu0 %v980
        %v982 = vpop.xlane.xlu0 %981
        %v983 = vsub.f32 %v910, %v982
        %v984 = vsub.f32 %v979, %v982
        %v985 = vmul.f32 %v983, 1.442695
        %v986 = vpow.pop %v985
        %v987 = vmul.f32 %v984, 1.442695
        %v988 = vpow.pop %v987
        %v989 = vadd.f32 %v986, %v988
        %990 = vadd.xlane.f32.xlu0 %v989
        %v991 = vpop.xlane.xlu0 %990
        %v992 = vrcp.pop %v991
        %v993 = vmul.f32 %v986, %v992
        %v994 = vmul.f32 %v988, %v992
        %v995 = vadd.f32 %v993, 1.0
        %v996 = vadd.f32 %v994, 1.0
        %v997 = vmul.f32 %v266, %v995
        %v998 = vmul.f32 %v267, %v996
        %v999 = vmul.f32 %v268, %v995
        %v1000 = vmul.f32 %v269, %v996
        %v1001 = vmul.f32 %v270, %v995
        %v1002 = vmul.f32 %v271, %v996
        %v1003 = vmul.f32 %v272, %v995
        %v1004 = vmul.f32 %v273, %v996
        %v1005 = vmul.f32 %v274, %v995
        %v1006 = vmul.f32 %v275, %v996
        %v1007 = vmul.f32 %v276, %v995
        %v1008 = vmul.f32 %v277, %v996
        %v1009 = vmul.f32 %v278, %v995
        %v1010 = vmul.f32 %v279, %v996
        %v1011 = vmul.f32 %v280, %v995
        %v1012 = vmul.f32 %v281, %v996
        %v1013 = vmul.f32 %v282, %v995
        %v1014 = vmul.f32 %v283, %v996
        %v1015 = vmul.f32 %v284, %v995
        %v1016 = vmul.f32 %v285, %v996
        %v1017 = vmul.f32 %v286, %v995
        %v1018 = vmul.f32 %v287, %v996
        %v1019 = vmul.f32 %v288, %v995
        %v1020 = vmul.f32 %v289, %v996
        %v1021 = vmul.f32 %v290, %v995
        %v1022 = vmul.f32 %v291, %v996
        %v1023 = vmul.f32 %v292, %v995
        %v1024 = vmul.f32 %v293, %v996
        %v1025 = vmul.f32 %v294, %v995
        %v1026 = vmul.f32 %v295, %v996
        %v1027 = vmul.f32 %v296, %v995
        %v1028 = vmul.f32 %v297, %v996
        %v1029 = vmul.f32 %v298, %v995
        %v1030 = vmul.f32 %v299, %v996
        %v1031 = vmul.f32 %v300, %v995
        %v1032 = vmul.f32 %v301, %v996
        %v1033 = vmul.f32 %v302, %v995
        %v1034 = vmul.f32 %v303, %v996
        %v1035 = vmul.f32 %v304, %v995
        %v1036 = vmul.f32 %v305, %v996
        %v1037 = vmul.f32 %v306, %v995
        %v1038 = vmul.f32 %v307, %v996
        %v1039 = vmul.f32 %v308, %v995
        %v1040 = vmul.f32 %v309, %v996
        %v1041 = vmul.f32 %v310, %v995
        %v1042 = vmul.f32 %v311, %v996
        %v1043 = vmul.f32 %v312, %v995
        %v1044 = vmul.f32 %v313, %v996
        %v1045 = vmul.f32 %v314, %v995
        %v1046 = vmul.f32 %v315, %v996
        %v1047 = vmul.f32 %v316, %v995
        %v1048 = vmul.f32 %v317, %v996
        %v1049 = vmul.f32 %v318, %v995
        %v1050 = vmul.f32 %v319, %v996
        %v1051 = vmul.f32 %v320, %v995
        %v1052 = vmul.f32 %v321, %v996
        %v1053 = vmul.f32 %v322, %v995
        %v1054 = vmul.f32 %v323, %v996
        %v1055 = vmul.f32 %v324, %v995
        %v1056 = vmul.f32 %v325, %v996
        %v1057 = vmul.f32 %v326, %v995
        %v1058 = vmul.f32 %v327, %v996
        %v1059 = vmul.f32 %v328, %v995
        %v1060 = vmul.f32 %v329, %v996
        %v1061 = vmul.f32 %v330, %v995
        %v1062 = vmul.f32 %v331, %v996
        %v1063 = vmul.f32 %v332, %v995
        %v1064 = vmul.f32 %v333, %v996
        %v1065 = vmul.f32 %v334, %v995
        %v1066 = vmul.f32 %v335, %v996
        %v1067 = vmul.f32 %v336, %v995
        %v1068 = vmul.f32 %v337, %v996
        %v1069 = vmul.f32 %v338, %v995
        %v1070 = vmul.f32 %v339, %v996
        %v1071 = vmul.f32 %v340, %v995
        %v1072 = vmul.f32 %v341, %v996
        %v1073 = vmul.f32 %v342, %v995
        %v1074 = vmul.f32 %v343, %v996
        %v1075 = vmul.f32 %v344, %v995
        %v1076 = vmul.f32 %v345, %v996
        %v1077 = vmul.f32 %v346, %v995
        %v1078 = vmul.f32 %v347, %v996
        %v1079 = vmul.f32 %v348, %v995
        %v1080 = vmul.f32 %v349, %v996
        %v1081 = vmul.f32 %v350, %v995
        %v1082 = vmul.f32 %v351, %v996
        %v1083 = vmul.f32 %v352, %v995
        %v1084 = vmul.f32 %v353, %v996
        %v1085 = vmul.f32 %v354, %v995
        %v1086 = vmul.f32 %v355, %v996
        %v1087 = vmul.f32 %v356, %v995
        %v1088 = vmul.f32 %v357, %v996
        %v1089 = vmul.f32 %v358, %v995
        %v1090 = vmul.f32 %v359, %v996
        %v1091 = vmul.f32 %v360, %v995
        %v1092 = vmul.f32 %v361, %v996
        %v1093 = vmul.f32 %v362, %v995
        %v1094 = vmul.f32 %v363, %v996
        %v1095 = vmul.f32 %v364, %v995
        %v1096 = vmul.f32 %v365, %v996
        %v1097 = vmul.f32 %v366, %v995
        %v1098 = vmul.f32 %v367, %v996
        %v1099 = vmul.f32 %v368, %v995
        %v1100 = vmul.f32 %v369, %v996
        %v1101 = vmul.f32 %v370, %v995
        %v1102 = vmul.f32 %v371, %v996
        %v1103 = vmul.f32 %v372, %v995
        %v1104 = vmul.f32 %v373, %v996
        %v1105 = vmul.f32 %v374, %v995
        %v1106 = vmul.f32 %v375, %v996
        %v1107 = vmul.f32 %v376, %v995
        %v1108 = vmul.f32 %v377, %v996
        %v1109 = vmul.f32 %v378, %v995
        %v1110 = vmul.f32 %v379, %v996
        %v1111 = vmul.f32 %v380, %v995
        %v1112 = vmul.f32 %v381, %v996
        %v1113 = vmul.f32 %v382, %v995
        %v1114 = vmul.f32 %v383, %v996
        %v1115 = vmul.f32 %v384, %v995
        %v1116 = vmul.f32 %v385, %v996
        %v1117 = vmul.f32 %v386, %v995
        %v1118 = vmul.f32 %v387, %v996
        %v1119 = vmul.f32 %v388, %v995
        %v1120 = vmul.f32 %v389, %v996
        %v1121 = vmul.f32 %v390, %v995
        %v1122 = vmul.f32 %v391, %v996
        %v1123 = vmul.f32 %v392, %v995
        %v1124 = vmul.f32 %v393, %v996
        %1125 = vst [vmem:[%s194] sm:$0xff] %v997
        %1126 = vst [vmem:[%s194 + $0x8] sm:$0xff] %v998
        %1127 = vst [vmem:[%s194 + $0x10] sm:$0xff] %v999
        %1128 = vst [vmem:[%s194 + $0x18] sm:$0xff] %v1000
        %1129 = vst [vmem:[%s194 + $0x20] sm:$0xff] %v1001
        %1130 = vst [vmem:[%s194 + $0x28] sm:$0xff] %v1002
        %1131 = vst [vmem:[%s194 + $0x30] sm:$0xff] %v1003
        %1132 = vst [vmem:[%s194 + $0x38] sm:$0xff] %v1004
        %1133 = vst [vmem:[%s194 + $0x40] sm:$0xff] %v1005
        %1134 = vst [vmem:[%s194 + $0x48] sm:$0xff] %v1006
        %1135 = vst [vmem:[%s194 + $0x50] sm:$0xff] %v1007
        %1136 = vst [vmem:[%s194 + $0x58] sm:$0xff] %v1008
        %1137 = vst [vmem:[%s194 + $0x60] sm:$0xff] %v1009
        %1138 = vst [vmem:[%s194 + $0x68] sm:$0xff] %v1010
        %1139 = vst [vmem:[%s194 + $0x70] sm:$0xff] %v1011
        %1140 = vst [vmem:[%s194 + $0x78] sm:$0xff] %v1012
        %1141 = vst [vmem:[%s194 + $0x80] sm:$0xff] %v1013
        %1142 = vst [vmem:[%s194 + $0x88] sm:$0xff] %v1014
        %1143 = vst [vmem:[%s194 + $0x90] sm:$0xff] %v1015
        %1144 = vst [vmem:[%s194 + $0x98] sm:$0xff] %v1016
        %1145 = vst [vmem:[%s194 + $0xa0] sm:$0xff] %v1017
        %1146 = vst [vmem:[%s194 + $0xa8] sm:$0xff] %v1018
        %1147 = vst [vmem:[%s194 + $0xb0] sm:$0xff] %v1019
        %1148 = vst [vmem:[%s194 + $0xb8] sm:$0xff] %v1020
        %1149 = vst [vmem:[%s194 + $0xc0] sm:$0xff] %v1021
        %1150 = vst [vmem:[%s194 + $0xc8] sm:$0xff] %v1022
        %1151 = vst [vmem:[%s194 + $0xd0] sm:$0xff] %v1023
        %1152 = vst [vmem:[%s194 + $0xd8] sm:$0xff] %v1024
        %1153 = vst [vmem:[%s194 + $0xe0] sm:$0xff] %v1025
        %1154 = vst [vmem:[%s194 + $0xe8] sm:$0xff] %v1026
        %1155 = vst [vmem:[%s194 + $0xf0] sm:$0xff] %v1027
        %1156 = vst [vmem:[%s194 + $0xf8] sm:$0xff] %v1028
        %1157 = vst [vmem:[%s194 + $0x100] sm:$0xff] %v1029
        %1158 = vst [vmem:[%s194 + $0x108] sm:$0xff] %v1030
        %1159 = vst [vmem:[%s194 + $0x110] sm:$0xff] %v1031
        %1160 = vst [vmem:[%s194 + $0x118] sm:$0xff] %v1032
        %1161 = vst [vmem:[%s194 + $0x120] sm:$0xff] %v1033
        %1162 = vst [vmem:[%s194 + $0x128] sm:$0xff] %v1034
        %1163 = vst [vmem:[%s194 + $0x130] sm:$0xff] %v1035
        %1164 = vst [vmem:[%s194 + $0x138] sm:$0xff] %v1036
        %1165 = vst [vmem:[%s194 + $0x140] sm:$0xff] %v1037
        %1166 = vst [vmem:[%s194 + $0x148] sm:$0xff] %v1038
        %1167 = vst [vmem:[%s194 + $0x150] sm:$0xff] %v1039
        %1168 = vst [vmem:[%s194 + $0x158] sm:$0xff] %v1040
        %1169 = vst [vmem:[%s194 + $0x160] sm:$0xff] %v1041
        %1170 = vst [vmem:[%s194 + $0x168] sm:$0xff] %v1042
        %1171 = vst [vmem:[%s194 + $0x170] sm:$0xff] %v1043
        %1172 = vst [vmem:[%s194 + $0x178] sm:$0xff] %v1044
        %1173 = vst [vmem:[%s194 + $0x180] sm:$0xff] %v1045
        %1174 = vst [vmem:[%s194 + $0x188] sm:$0xff] %v1046
        %1175 = vst [vmem:[%s194 + $0x190] sm:$0xff] %v1047
        %1176 = vst [vmem:[%s194 + $0x198] sm:$0xff] %v1048
        %1177 = vst [vmem:[%s194 + $0x1a0] sm:$0xff] %v1049
        %1178 = vst [vmem:[%s194 + $0x1a8] sm:$0xff] %v1050
        %1179 = vst [vmem:[%s194 + $0x1b0] sm:$0xff] %v1051
        %1180 = vst [vmem:[%s194 + $0x1b8] sm:$0xff] %v1052
        %1181 = vst [vmem:[%s194 + $0x1c0] sm:$0xff] %v1053
        %1182 = vst [vmem:[%s194 + $0x1c8] sm:$0xff] %v1054
        %1183 = vst [vmem:[%s194 + $0x1d0] sm:$0xff] %v1055
        %1184 = vst [vmem:[%s194 + $0x1d8] sm:$0xff] %v1056
        %1185 = vst [vmem:[%s194 + $0x1e0] sm:$0xff] %v1057
        %1186 = vst [vmem:[%s194 + $0x1e8] sm:$0xff] %v1058
        %1187 = vst [vmem:[%s194 + $0x1f0] sm:$0xff] %v1059
        %1188 = vst [vmem:[%s194 + $0x1f8] sm:$0xff] %v1060
        %1189 = vst [vmem:[%s194 + $0x200] sm:$0xff] %v1061
        %1190 = vst [vmem:[%s194 + $0x208] sm:$0xff] %v1062
        %1191 = vst [vmem:[%s194 + $0x210] sm:$0xff] %v1063
        %1192 = vst [vmem:[%s194 + $0x218] sm:$0xff] %v1064
        %1193 = vst [vmem:[%s194 + $0x220] sm:$0xff] %v1065
        %1194 = vst [vmem:[%s194 + $0x228] sm:$0xff] %v1066
        %1195 = vst [vmem:[%s194 + $0x230] sm:$0xff] %v1067
        %1196 = vst [vmem:[%s194 + $0x238] sm:$0xff] %v1068
        %1197 = vst [vmem:[%s194 + $0x240] sm:$0xff] %v1069
        %1198 = vst [vmem:[%s194 + $0x248] sm:$0xff] %v1070
        %1199 = vst [vmem:[%s194 + $0x250] sm:$0xff] %v1071
        %1200 = vst [vmem:[%s194 + $0x258] sm:$0xff] %v1072
        %1201 = vst [vmem:[%s194 + $0x260] sm:$0xff] %v1073
        %1202 = vst [vmem:[%s194 + $0x268] sm:$0xff] %v1074
        %1203 = vst [vmem:[%s194 + $0x270] sm:$0xff] %v1075
        %1204 = vst [vmem:[%s194 + $0x278] sm:$0xff] %v1076
        %1205 = vst [vmem:[%s194 + $0x280] sm:$0xff] %v1077
        %1206 = vst [vmem:[%s194 + $0x288] sm:$0xff] %v1078
        %1207 = vst [vmem:[%s194 + $0x290] sm:$0xff] %v1079
        %1208 = vst [vmem:[%s194 + $0x298] sm:$0xff] %v1080
        %1209 = vst [vmem:[%s194 + $0x2a0] sm:$0xff] %v1081
        %1210 = vst [vmem:[%s194 + $0x2a8] sm:$0xff] %v1082
        %1211 = vst [vmem:[%s194 + $0x2b0] sm:$0xff] %v1083
        %1212 = vst [vmem:[%s194 + $0x2b8] sm:$0xff] %v1084
        %1213 = vst [vmem:[%s194 + $0x2c0] sm:$0xff] %v1085
        %1214 = vst [vmem:[%s194 + $0x2c8] sm:$0xff] %v1086
        %1215 = vst [vmem:[%s194 + $0x2d0] sm:$0xff] %v1087
        %1216 = vst [vmem:[%s194 + $0x2d8] sm:$0xff] %v1088
        %1217 = vst [vmem:[%s194 + $0x2e0] sm:$0xff] %v1089
        %1218 = vst [vmem:[%s194 + $0x2e8] sm:$0xff] %v1090
        %1219 = vst [vmem:[%s194 + $0x2f0] sm:$0xff] %v1091
        %1220 = vst [vmem:[%s194 + $0x2f8] sm:$0xff] %v1092
        %1221 = vst [vmem:[%s194 + $0x300] sm:$0xff] %v1093
        %1222 = vst [vmem:[%s194 + $0x308] sm:$0xff] %v1094
        %1223 = vst [vmem:[%s194 + $0x310] sm:$0xff] %v1095
        %1224 = vst [vmem:[%s194 + $0x318] sm:$0xff] %v1096
        %1225 = vst [vmem:[%s194 + $0x320] sm:$0xff] %v1097
        %1226 = vst [vmem:[%s194 + $0x328] sm:$0xff] %v1098
        %1227 = vst [vmem:[%s194 + $0x330] sm:$0xff] %v1099
        %1228 = vst [vmem:[%s194 + $0x338] sm:$0xff] %v1100
        %1229 = vst [vmem:[%s194 + $0x340] sm:$0xff] %v1101
        %1230 = vst [vmem:[%s194 + $0x348] sm:$0xff] %v1102
        %1231 = vst [vmem:[%s194 + $0x350] sm:$0xff] %v1103
        %1232 = vst [vmem:[%s194 + $0x358] sm:$0xff] %v1104
        %1233 = vst [vmem:[%s194 + $0x360] sm:$0xff] %v1105
        %1234 = vst [vmem:[%s194 + $0x368] sm:$0xff] %v1106
        %1235 = vst [vmem:[%s194 + $0x370] sm:$0xff] %v1107
        %1236 = vst [vmem:[%s194 + $0x378] sm:$0xff] %v1108
        %1237 = vst [vmem:[%s194 + $0x380] sm:$0xff] %v1109
        %1238 = vst [vmem:[%s194 + $0x388] sm:$0xff] %v1110
        %1239 = vst [vmem:[%s194 + $0x390] sm:$0xff] %v1111
        %1240 = vst [vmem:[%s194 + $0x398] sm:$0xff] %v1112
        %1241 = vst [vmem:[%s194 + $0x3a0] sm:$0xff] %v1113
        %1242 = vst [vmem:[%s194 + $0x3a8] sm:$0xff] %v1114
        %1243 = vst [vmem:[%s194 + $0x3b0] sm:$0xff] %v1115
        %1244 = vst [vmem:[%s194 + $0x3b8] sm:$0xff] %v1116
        %1245 = vst [vmem:[%s194 + $0x3c0] sm:$0xff] %v1117
        %1246 = vst [vmem:[%s194 + $0x3c8] sm:$0xff] %v1118
        %1247 = vst [vmem:[%s194 + $0x3d0] sm:$0xff] %v1119
        %1248 = vst [vmem:[%s194 + $0x3d8] sm:$0xff] %v1120
        %1249 = vst [vmem:[%s194 + $0x3e0] sm:$0xff] %v1121
        %1250 = vst [vmem:[%s194 + $0x3e8] sm:$0xff] %v1122
        %1251 = vst [vmem:[%s194 + $0x3f0] sm:$0xff] %v1123
        %1252 = vst [vmem:[%s194 + $0x3f8] sm:$0xff] %v1124
        %v1255 = vrot.slane %v994, 7
        %vm1256 = vcmask 1040384
        %v1257 = vsel %vm1256, %v993, %v1255
        %v1259 = vlaneseq
        %vm1260 = vcmp.ge.s32.totalorder %v1259, 0
        %vm1261 = vcmp.lt.s32.totalorder %v1259, 256
        %vm1262 = vmand %vm1260, %vm1261
        %1263 = vst.msk [vmem:[%s201] sm:$0x3] %vm1262, %v1257
        %s1264 = sand.u32 %s79, 1
        %s1265 = scalar_lea.sflag [#allocation4], %s1264
        %s1266 = sand.u32 %s79, 1
        %s1267 = smul.addr %s1266, 1024
        %s1268 = scalar_lea.vmem [#allocation5], %s1267
        %s1269 = sand.u32 %s105, 1
        %s1270 = scalar_lea.sflag [#allocation7], %s1269
        %s1271 = sand.u32 %s105, 1
        %s1272 = smul.addr %s1271, 2
        %s1273 = scalar_lea.vmem [#allocation6], %s1272
        // Predicated region
        $region33: #{tpu_custom_call.1} parent=27 // pred_check
          %p1274 = pneg %p89
        $region34: #{tpu_custom_call.1} parent=27 // pred_check_branch
          %1276 = sbr.rel (%p1274) target = $region36
        $region35: #{tpu_custom_call.1} parent=27 // pred_region
          %1278 = vsyncadd %s1265, 0
          %s1279 = smul.addr %s24, 128
          %s1280 = smul.addr %s1279, 8
          %s1281 = scalar_lea.hbm %s2, %s1280
          %s1282 = sshll.u32 %s1268, 4
          %s1283 = int_to_ptr.vmem [resolvable:$true] %s1282
          %s1284 = sshll.u32 %s1281, 4
          %s1285 = int_to_ptr.hbm [resolvable:$true] %s1284
          %1290 = dma.vmem_to_hbm [thread:$0]  %s1283, 16384, %s1285, %s1265, 256, 256, 16
        $region36: #{tpu_custom_call.1} parent=27 // pred_fallthru
          _
        // Predicated region
        $region37: #{tpu_custom_call.1} parent=27 // pred_check
          %p1291 = pneg %p115
        $region38: #{tpu_custom_call.1} parent=27 // pred_check_branch
          %1293 = sbr.rel (%p1291) target = $region40
        $region39: #{tpu_custom_call.1} parent=27 // pred_region
          %1295 = vsyncadd %s1270, 0
          %s1296 = smul.addr %s24, 2
          %s1297 = scalar_lea.hbm %s3, %s1296
          %s1299 = sshll.u32 %s1273, 4
          %s1300 = int_to_ptr.vmem [resolvable:$true] %s1299
          %s1301 = sshll.u32 %s1297, 4
          %s1302 = int_to_ptr.hbm [resolvable:$true] %s1301
          %1304 = dma.vmem_to_hbm [thread:$0]  %s1300, 32, %s1302, %s1270
        $region40: #{tpu_custom_call.1} parent=27 // pred_fallthru
          _
      $region28: #{tpu_custom_call.1} parent=5 // pred_fallthru
        _
      %p1305 = scmp.le.s32.totalorder 2, %s19
      // Predicated region
      $region41: #{tpu_custom_call.1} parent=5 // pred_check
        %p1306 = pneg %p1305
      $region42: #{tpu_custom_call.1} parent=5 // pred_check_branch
        %1308 = sbr.rel (%p1306) target = $region44
      $region43: #{tpu_custom_call.1} parent=5 // pred_region
        %s1309 = ssub.s32 %s19, 2
        // Predicated region
        $region45: #{tpu_custom_call.1} parent=43 // pred_check
          %p1310 = pneg %p95
        $region46: #{tpu_custom_call.1} parent=43 // pred_check_branch
          %1312 = sbr.rel (%p1310) target = $region48
        $region47: #{tpu_custom_call.1} parent=43 // pred_region
          %s1313 = sand.u32 %s80, 1
          %s1314 = scalar_lea.sflag [#allocation4], %s1313
          %s1315 = sand.u32 %s80, 1
          %s1316 = smul.addr %s1315, 1024
          %s1317 = scalar_lea.vmem [#allocation5], %s1316
          %1319 = dma.done %s1314, 16384
        $region48: #{tpu_custom_call.1} parent=43 // pred_fallthru
          _
        // Predicated region
        $region49: #{tpu_custom_call.1} parent=43 // pred_check
          %p1320 = pneg %p121
        $region50: #{tpu_custom_call.1} parent=43 // pred_check_branch
          %1322 = sbr.rel (%p1320) target = $region52
        $region51: #{tpu_custom_call.1} parent=43 // pred_region
          %s1323 = sand.u32 %s106, 1
          %s1324 = scalar_lea.sflag [#allocation7], %s1323
          %s1325 = sand.u32 %s106, 1
          %s1326 = smul.addr %s1325, 2
          %s1327 = scalar_lea.vmem [#allocation6], %s1326
          %1329 = dma.done %s1324, 32
        $region52: #{tpu_custom_call.1} parent=43 // pred_fallthru
          _
      $region44: #{tpu_custom_call.1} parent=5 // pred_fallthru
        _
    $region6: #{tpu_custom_call.1} parent=1 // loop_footer
      %s23 = sadd.s32 1, %s19
    $region7: #{tpu_custom_call.1} parent=1 // loop_footer_branch
      %18 = sbr.rel target = $region3
    $region8: #{tpu_custom_call.1} parent=1 // loop_exit
      _
    %1330 = vsyncpa [#allocation3], 1
    %s1331 = scalar_lea.sflag [#allocation3], 1
    %1332 = vsyncpa %s1331, 1
    %1333 = vsyncpa [#allocation4], 1
    %s1334 = scalar_lea.sflag [#allocation4], 1
    %1335 = vsyncpa %s1334, 1
    %1336 = vsyncpa [#allocation7], 1
    %s1337 = scalar_lea.sflag [#allocation7], 1
    %1338 = vsyncpa %s1337, 1

</llo_original>
